<compile_context>
chip_gen: v7x
topology: tpu7x:2x2x1
jax: 0.10.0
libtpu: 0.0.40
codegen_flags: <defaults>
</compile_context>

<pallas_src>
import functools
import math

import jax
import jax.numpy as jnp
from jax import lax
from jax.experimental import pallas as pl
from jax.experimental.pallas import tpu as pltpu


def _round_up(x, m):
    return ((x + m - 1) // m) * m


def _pick_lc_tile(lc, num_embed, tb, max_tile=2048, budget_bytes=24 << 20):
    """Lane-dense LC tile: multiple of 128 (or the full width), VMEM-budgeted.

    Double-buffered VMEM use is ~ 2*4*(tb*TLC + num_embed*TLC + tb) bytes; cap
    TLC so that stays well under the 32 MiB scoped default (v7x-safe).
    """
    if lc <= 128:
        return lc  # full width; block equals the array dim (allowed).
    cap_cols = (budget_bytes // (2 * 4) - tb) // (tb + num_embed)
    cap = max(128, min(max_tile, (cap_cols // 128) * 128))
    if lc <= cap:
        return lc  # full width fits comfortably -> single LC block.
    return cap     # multiple of 128; ragged edge block is masked by Pallas.


def _embed_interp_kernel(ori_ref, emb_ref, out_ref, *, num_embed):
    """ori_ref: (TB,1) f32, emb_ref: (num_embed, TLC), out_ref: (TB, TLC) f32."""
    tb = ori_ref.shape[0]
    n = jnp.float32(num_embed)

    # Map ori in [-1, 1] to s in [0, num_embed]; clip guards out-of-range and
    # garbage values in masked (ragged-edge) rows.
    s = jnp.clip((ori_ref[...] + 1.0) * 0.5 * n, 0.0, n)            # (TB, 1)

    # Circular tent weights against the ORIGINAL (unpadded) table:
    #   w_e = max(0, 1 - circ_dist(e, s)),  circ_dist = min(|e-s|, N - |e-s|)
    # Exactly equivalent to searchsorted + clamped distances + gather on the
    # circularly padded table (left weight (ceil(s)-s) at (ceil(s)-1) mod N,
    # right weight 1-(ceil(s)-s) at ceil(s) mod N).
    e = lax.broadcasted_iota(jnp.int32, (tb, num_embed), 1).astype(jnp.float32)
    d = jnp.abs(e - s)                                              # (TB, N)
    d = jnp.minimum(d, n - d)                                       # circular wrap
    w = jnp.maximum(0.0, 1.0 - d)                                   # rows sum to 1

    emb = emb_ref[...].astype(jnp.float32)                          # cast in-kernel
    out_ref[...] = jnp.dot(w, emb, preferred_element_type=jnp.float32)


def embedding_forward(ori, embeds, *, block_b=512, max_lc_tile=2048):
    """Pallas equivalent of Embedding.forward.

    ori: (B,) float in [-1, 1]; embeds: (num_embed, num_layer, ch).
    Returns (B, num_layer, ch) float32.
    """
    num_embed, num_layer, ch = embeds.shape
    LC = num_layer * ch
    B = ori.shape[0]

    if num_embed == 1:
        # Degenerate case: the tent form doesn't apply, but the torch module
        # always returns the single row (weights sum to 1 onto embeds[0]).
        row = embeds.reshape(1, num_layer, ch).astype(jnp.float32)
        return jnp.broadcast_to(row, (B, num_layer, ch))

    emb_flat = embeds.reshape(num_embed, LC)          # native dtype, no HBM copy
    ori2d = ori.reshape(B, 1).astype(jnp.float32)

    TB = min(block_b, _round_up(B, 8))
    TLC = _pick_lc_tile(LC, num_embed, TB, max_lc_tile)

    # v7x megacore: guarantee >= 2 parallel grid steps for small problems.
    if pl.cdiv(B, TB) == 1 and pl.cdiv(LC, TLC) == 1 and B > 8:
        TB = max(8, _round_up(pl.cdiv(B, 2), 8))

    # LC axis OUTER, batch axis INNER: the emb block index only changes on the
    # slow axis, so the table tile is reused across consecutive batch tiles.
    grid = (pl.cdiv(LC, TLC), pl.cdiv(B, TB))

    out_flat = pl.pallas_call(
        functools.partial(_embed_interp_kernel, num_embed=num_embed),
        out_shape=jax.ShapeDtypeStruct((B, LC), jnp.float32),
        grid=grid,
        in_specs=[
            pl.BlockSpec((TB, 1), lambda j, i: (i, 0)),
            pl.BlockSpec((num_embed, TLC), lambda j, i: (0, j)),
        ],
        out_specs=pl.BlockSpec((TB, TLC), lambda j, i: (i, j)),
        compiler_params=pltpu.CompilerParams(
            dimension_semantics=("parallel", "parallel")),
        cost_estimate=pl.CostEstimate(
            flops=2 * B * num_embed * LC,
            transcendentals=0,
            bytes_accessed=4 * (B * LC + num_embed * LC + B)),
    )(ori2d, emb_flat)

    return out_flat.reshape(B, num_layer, ch)


def embedding_forward_ref(ori, embeds):
    """Pure-JAX reference mirroring the PyTorch code (searchsorted + gather)."""
    num_embed = embeds.shape[0]
    emb_cat = jnp.concatenate([embeds[-1:], embeds, embeds[:1]], axis=0)
    s = (ori + 1.0) / 2.0 * num_embed
    t_value = jnp.arange(-1, num_embed + 1)
    right_idx = jnp.searchsorted(t_value, s, side="left")
    left_idx = right_idx - 1
    left_dis = jnp.clip(s - t_value[left_idx], 0.0, 1.0)[:, None, None]
    right_dis = jnp.clip(t_value[right_idx] - s, 0.0, 1.0)[:, None, None]
    return emb_cat[left_idx] * right_dis + emb_cat[right_idx] * left_dis


if __name__ == "__main__":
    num_layer, num_embed, ch = 4, 16, 32
    B = 10  # not a multiple of 8 -> exercises the ragged edge-block path

    key = jax.random.PRNGKey(0)
    k_emb, k_ori, k_ori2 = jax.random.split(key, 3)

    # Deterministic parameter init matching nn.Parameter(randn(...) / sqrt(ch)).
    embeds = (jax.random.normal(k_emb, (num_embed, num_layer, ch), jnp.float32)
              / math.sqrt(ch))

    # Inputs in [-1, 1]; include exact endpoints / grid points to exercise edges.
    ori = jnp.concatenate([
        jnp.array([-1.0, 1.0, 0.0], jnp.float32),
        jax.random.uniform(k_ori, (B - 3,), jnp.float32, minval=-1.0, maxval=1.0),
    ])

    out = embedding_forward(ori, embeds)
    jax.block_until_ready(out)
    ref = embedding_forward_ref(ori, embeds)
    assert out.shape == (B, num_layer, ch)
    assert jnp.allclose(out, ref, atol=1e-5, rtol=1e-5)

    # Larger batch: exercises the multi-tile grid (2 batch tiles, ragged edge).
    B2 = 300
    ori2 = jax.random.uniform(k_ori2, (B2,), jnp.float32, minval=-1.0, maxval=1.0)
    out2 = embedding_forward(ori2, embeds)
    jax.block_until_ready(out2)
    ref2 = embedding_forward_ref(ori2, embeds)
    assert out2.shape == (B2, num_layer, ch)
    assert jnp.allclose(out2, ref2, atol=1e-5, rtol=1e-5)

    # Degenerate num_embed == 1 path (pure-JAX broadcast, matches torch).
    emb1 = jax.random.normal(jax.random.PRNGKey(1), (1, num_layer, ch), jnp.float32)
    out3 = embedding_forward(ori, emb1)
    jax.block_until_ready(out3)
    ref3 = embedding_forward_ref(ori, emb1)
    assert jnp.allclose(out3, ref3, atol=1e-5, rtol=1e-5)

    print("KERNEL_OK")
</pallas_src>

<mosaic_0001>
module attributes {stable_mosaic.version = 11 : i64} {
  func.func @_embed_interp_kernel(%arg0: i32, %arg1: i32, %arg2: memref<8x1xf32, #tpu.memory_space<vmem>>, %arg3: memref<16x128xf32, #tpu.memory_space<vmem>>, %arg4: memref<8x128xf32, #tpu.memory_space<vmem>>) attributes {dimension_semantics = [#tpu.dimension_semantics<parallel>, #tpu.dimension_semantics<parallel>], iteration_bounds = array<i64: 1, 2>, scalar_prefetch = 0 : i64, scratch_operands = 0 : i64, tpu.core_type = #tpu.core_type<tc>, window_params = [{transform_indices = @transform_0, window_bounds = array<i64: 8, 1>}, {transform_indices = @transform_1, window_bounds = array<i64: 16, 128>}, {transform_indices = @transform_2, window_bounds = array<i64: 8, 128>}]} {
    %c0 = arith.constant 0 : index
    %c0_0 = arith.constant 0 : index
    %0 = vector.load %arg2[%c0, %c0_0] : memref<8x1xf32, #tpu.memory_space<vmem>>, vector<8x1xf32>
    %cst = arith.constant 1.000000e+00 : f32
    %1 = vector.broadcast %cst : f32 to vector<8x1xf32>
    %2 = arith.addf %0, %1 : vector<8x1xf32>
    %cst_1 = arith.constant 5.000000e-01 : f32
    %3 = vector.broadcast %cst_1 : f32 to vector<8x1xf32>
    %4 = arith.mulf %2, %3 : vector<8x1xf32>
    %cst_2 = arith.constant 1.600000e+01 : f32
    %5 = vector.broadcast %cst_2 : f32 to vector<8x1xf32>
    %6 = arith.mulf %4, %5 : vector<8x1xf32>
    %cst_3 = arith.constant 0.000000e+00 : f32
    %cst_4 = arith.constant 1.600000e+01 : f32
    %7 = vector.broadcast %cst_3 : f32 to vector<8x1xf32>
    %8 = arith.maximumf %7, %6 : vector<8x1xf32>
    %9 = vector.broadcast %cst_4 : f32 to vector<8x1xf32>
    %10 = arith.minimumf %9, %8 : vector<8x1xf32>
    %11 = tpu.iota {dimensions = array<i32: 1>} : vector<8x16xi32>
    %12 = arith.sitofp %11 : vector<8x16xi32> to vector<8x16xf32>
    %13 = vector.broadcast %10 : vector<8x1xf32> to vector<8x16xf32>
    %14 = arith.subf %12, %13 : vector<8x16xf32>
    %15 = math.absf %14 : vector<8x16xf32>
    %cst_5 = arith.constant 1.600000e+01 : f32
    %16 = vector.broadcast %cst_5 : f32 to vector<8x16xf32>
    %17 = arith.subf %16, %15 : vector<8x16xf32>
    %18 = arith.minimumf %15, %17 : vector<8x16xf32>
    %cst_6 = arith.constant 1.000000e+00 : f32
    %19 = vector.broadcast %cst_6 : f32 to vector<8x16xf32>
    %20 = arith.subf %19, %18 : vector<8x16xf32>
    %cst_7 = arith.constant 0.000000e+00 : f32
    %21 = vector.broadcast %cst_7 : f32 to vector<8x16xf32>
    %22 = arith.maximumf %21, %20 : vector<8x16xf32>
    %c0_8 = arith.constant 0 : index
    %c0_9 = arith.constant 0 : index
    %23 = vector.load %arg3[%c0_8, %c0_9] : memref<16x128xf32, #tpu.memory_space<vmem>>, vector<16x128xf32>
    %cst_10 = arith.constant dense<0.000000e+00> : vector<8x128xf32>
    %24 = tpu.matmul %22, %23, %cst_10 {dimension_numbers = #tpu.dot_dimension_numbers<[1], [0], [0], [1], [0, 0, 1, 1], [], []>} : vector<8x16xf32>, vector<16x128xf32>, vector<8x128xf32> -> vector<8x128xf32>
    %c0_11 = arith.constant 0 : index
    %c0_12 = arith.constant 0 : index
    %25 = vector.load %arg4[%c0_11, %c0_12] : memref<8x128xf32, #tpu.memory_space<vmem>>, vector<8x128xf32>
    tpu.vector_store %arg4[%c0_11, %c0_12], %24 {strides = array<i32>} : memref<8x128xf32, #tpu.memory_space<vmem>>, vector<8x128xf32>,
    return
  }
  func.func @transform_0(%arg0: i32, %arg1: i32) -> (i32, i32) {
    %c0_i32 = arith.constant 0 : i32
    %c0_i32_0 = arith.constant 0 : i32
    return %arg1, %c0_i32 : i32, i32
  }
  func.func @transform_1(%arg0: i32, %arg1: i32) -> (i32, i32) {
    %c0_i32 = arith.constant 0 : i32
    %c0_i32_0 = arith.constant 0 : i32
    return %c0_i32, %arg0 : i32, i32
  }
  func.func @transform_2(%arg0: i32, %arg1: i32) -> (i32, i32) {
    %c0_i32 = arith.constant 0 : i32
    return %arg1, %arg0 : i32, i32
  }
}

</mosaic_0001>

<llo_original>
// kernel: tpu_custom_call.1
$region0: #{tpu_custom_call.1}
  #allocation0 [shape = 'u32[]', space=smem, size = 0x4, offset = 0x4, fixed_abs, tag = 'smem constant byte address 0x4 - core index']
  #allocation1 [shape = 'u32[144,128]{1,0:T(1,128)}', space=vmem, size = 0x12000, scoped, tag = 'internal scratch']
  %s0 = inlined_call_operand.vmem [shape: f32[10,1], index: 0, kind: input, shape index: {}]
  %s1 = inlined_call_operand.vmem [shape: f32[16,128], index: 1, kind: input, shape index: {}]
  %s2 = inlined_call_operand.hbm [shape: f32[10,128], index: 2, kind: output, shape index: {}]
  %s3 = sld [smem:[#allocation0]]
  $region41: #{tpu_custom_call.1} parent=0
    _
  %s5 = ssub.s32 1, %s3
  %s6 = scalar_select 0, %s5, %s3
  $region1: #{tpu_custom_call.1} parent=0
    #allocation2 [shape = 'u8[8192]{0}', space=vmem, size = 0x2000, scoped, tag = 'output window, operand 0']
    #allocation3 [shape = 's32[2]{0}', space=sflag, size = 0x8, scoped, tag = 'scoped memory for tpu_custom_call.1']
    %7 = vsyncpa [#allocation3], 0
    %s8 = scalar_lea.sflag [#allocation3], 1
    %9 = vsyncpa %s8, 0
    loop: start=0, step=1, limit=4
    $region2: #{tpu_custom_call.1} parent=1 // loop_pre_header
      _
    $region3: #{tpu_custom_call.1} parent=1 // loop_header
      %s11 = sphi 0, %s15
      %p12 = scmp.ge.s32.totalorder %s11, 4
      %s18 = sphi 0, %s30
      %s19 = sphi 0, %s26
      %s20 = sphi 0, %s18
      %s21 = sphi 0, %s19
      %s22 = sphi 0, %s20
      %s23 = sphi 0, %s21
      %s33 = sphi 0, %s35
      %s36 = sphi 0, %s33
      %s37 = sphi 0, %s36
      %s53 = sphi 0, %s37
      %s59 = sphi 0, %s61
      %s62 = sphi 0, %s59
      %s63 = sphi 0, %s62
      %s79 = sphi 0, %s63
      %s87 = sphi 0, %s89
      %s90 = sphi 0, %s87
      %s91 = sphi 0, %s90
      %s107 = sphi 0, %s91
    $region4: #{tpu_custom_call.1} parent=1 // loop_header_branch
      %14 = sbr.rel (%p12) target = $region8
    $region5: #{tpu_custom_call.1} parent=1 // loop_body
      %s16 = ssub.s32 %s11, 1
      %s17 = ssub.s32 %s11, 2
      %s24 = sadd.s32 1, %s19
      %p25 = scmp.ge.s32.totalorder %s24, 2
      %s26 = scalar_select %p25, 0, %s24
      %s27 = sadd.s32 1, %s18
      %s28 = scalar_select %p25, %s27, %s18
      %p29 = scmp.ge.s32.totalorder %s28, 1
      %s30 = scalar_select %p29, 0, %s28
      %s31 = ssub.s32 %s19, %s26
      %p32 = scmp.eq.s32.totalorder %s31, 0
      %s34 = sadd.s32 %s33, 1
      %s35 = scalar_select %p32, %s33, %s34
      %p38 = pneg %p32
      %p39 = scmp.eq.s32.totalorder %s11, 1
      %p40 = por %p38, %p39
      %p41 = scmp.ne.s32.totalorder %s33, %s36
      %p42 = scmp.eq.s32.totalorder %s11, 0
      %p43 = por %p41, %p42
      %p44 = scmp.ne.s32.totalorder %s33, %s36
      %p45 = scmp.eq.s32.totalorder %s16, 1
      %p46 = por %p44, %p45
      %p47 = scmp.ne.s32.totalorder %s36, %s37
      %p48 = scmp.eq.s32.totalorder %s16, 0
      %p49 = por %p47, %p48
      %p50 = scmp.ne.s32.totalorder %s36, %s37
      %p51 = scmp.eq.s32.totalorder %s17, 1
      %p52 = por %p50, %p51
      %p54 = scmp.ne.s32.totalorder %s37, %s53
      %p55 = scmp.eq.s32.totalorder %s17, 0
      %p56 = por %p54, %p55
      %s57 = ssub.s32 %s18, %s30
      %p58 = scmp.eq.s32.totalorder %s57, 0
      %s60 = sadd.s32 %s59, 1
      %s61 = scalar_select %p58, %s59, %s60
      %p64 = pneg %p58
      %p65 = scmp.eq.s32.totalorder %s11, 1
      %p66 = por %p64, %p65
      %p67 = scmp.ne.s32.totalorder %s59, %s62
      %p68 = scmp.eq.s32.totalorder %s11, 0
      %p69 = por %p67, %p68
      %p70 = scmp.ne.s32.totalorder %s59, %s62
      %p71 = scmp.eq.s32.totalorder %s16, 1
      %p72 = por %p70, %p71
      %p73 = scmp.ne.s32.totalorder %s62, %s63
      %p74 = scmp.eq.s32.totalorder %s16, 0
      %p75 = por %p73, %p74
      %p76 = scmp.ne.s32.totalorder %s62, %s63
      %p77 = scmp.eq.s32.totalorder %s17, 1
      %p78 = por %p76, %p77
      %p80 = scmp.ne.s32.totalorder %s63, %s79
      %p81 = scmp.eq.s32.totalorder %s17, 0
      %p82 = por %p80, %p81
      %s83 = ssub.s32 %s19, %s26
      %s84 = ssub.s32 %s18, %s30
      %s85 = sor.u32 %s83, %s84
      %p86 = scmp.eq.s32.totalorder %s85, 0
      %s88 = sadd.s32 %s87, 1
      %s89 = scalar_select %p86, %s87, %s88
      %p92 = pneg %p86
      %p93 = scmp.eq.s32.totalorder %s11, 1
      %p94 = por %p92, %p93
      %p95 = scmp.ne.s32.totalorder %s87, %s90
      %p96 = scmp.eq.s32.totalorder %s11, 0
      %p97 = por %p95, %p96
      %p98 = scmp.ne.s32.totalorder %s87, %s90
      %p99 = scmp.eq.s32.totalorder %s16, 1
      %p100 = por %p98, %p99
      %p101 = scmp.ne.s32.totalorder %s90, %s91
      %p102 = scmp.eq.s32.totalorder %s16, 0
      %p103 = por %p101, %p102
      %p104 = scmp.ne.s32.totalorder %s90, %s91
      %p105 = scmp.eq.s32.totalorder %s17, 1
      %p106 = por %p104, %p105
      %p108 = scmp.ne.s32.totalorder %s91, %s107
      %p109 = scmp.eq.s32.totalorder %s17, 0
      %p110 = por %p108, %p109
      %p111 = scmp.le.s32.totalorder 1, %s11
      %p112 = scmp.lt.s32.totalorder %s11, 3
      %p113 = pnand %p111, %p112
      %p114 = pneg %p113
      // Predicated region
      $region9: #{tpu_custom_call.1} parent=5 // pred_check
        _
      $region10: #{tpu_custom_call.1} parent=5 // pred_check_branch
        %116 = sbr.rel (%p113) target = $region12
      $region11: #{tpu_custom_call.1} parent=5 // pred_region
        %s117 = ssub.s32 %s11, 1
        // Predicated region
        $region13: #{tpu_custom_call.1} parent=11 // pred_check
          %p118 = pneg %p75
        $region14: #{tpu_custom_call.1} parent=11 // pred_check_branch
          %120 = sbr.rel (%p118) target = $region16
        $region15: #{tpu_custom_call.1} parent=11 // pred_region
          %p121 = scmp.lt.s32.totalorder %s20, 0
          %s122 = scalar_select %p121, %s20, 0
          %s123 = smul.addr %s122, 8
          %s124 = scalar_lea.vmem %s1, %s123
        $region16: #{tpu_custom_call.1} parent=11 // pred_fallthru
          _
      $region12: #{tpu_custom_call.1} parent=5 // pred_fallthru
        _
      %p125 = scmp.lt.s32.totalorder %s11, 2
      // Predicated region
      $region17: #{tpu_custom_call.1} parent=5 // pred_check
        %p126 = pneg %p125
      $region18: #{tpu_custom_call.1} parent=5 // pred_check_branch
        %128 = sbr.rel (%p126) target = $region20
      $region19: #{tpu_custom_call.1} parent=5 // pred_region
        // Predicated region
        $region21: #{tpu_custom_call.1} parent=19 // pred_check
          %p129 = pneg %p43
        $region22: #{tpu_custom_call.1} parent=19 // pred_check_branch
          %131 = sbr.rel (%p129) target = $region24
        $region23: #{tpu_custom_call.1} parent=19 // pred_region
          %p132 = scmp.lt.s32.totalorder %s19, 1
          %s133 = scalar_select %p132, %s19, 1
          %s134 = smul.addr %s133, 8
          %s135 = scalar_lea.vmem %s0, %s134
        $region24: #{tpu_custom_call.1} parent=19 // pred_fallthru
          _
      $region20: #{tpu_custom_call.1} parent=5 // pred_fallthru
        _
      %p136 = scmp.le.s32.totalorder 1, %s11
      %p137 = scmp.lt.s32.totalorder %s11, 3
      %p138 = pnand %p136, %p137
      %p139 = pneg %p138
      // Predicated region
      $region25: #{tpu_custom_call.1} parent=5 // pred_check
        _
      $region26: #{tpu_custom_call.1} parent=5 // pred_check_branch
        %141 = sbr.rel (%p138) target = $region28
      $region27: #{tpu_custom_call.1} parent=5 // pred_region
        %s142 = ssub.s32 %s11, 1
        %p143 = scmp.lt.s32.totalorder %s21, 1
        %s144 = scalar_select %p143, %s21, 1
        %s145 = smul.addr %s144, 8
        %s146 = scalar_lea.vmem %s0, %s145
        %p147 = pneg %p49
        %p148 = pneg %p46
        %p149 = scmp.lt.s32.totalorder %s20, 0
        %s150 = scalar_select %p149, %s20, 0
        %s151 = smul.addr %s150, 8
        %s152 = scalar_lea.vmem %s1, %s151
        %p153 = pneg %p75
        %p154 = pneg %p72
        %p155 = pneg %p103
        %p156 = pneg %p100
        %s157 = sand.u32 %s90, 1
        %s158 = scalar_lea.sflag [#allocation3], %s157
        %s159 = sand.u32 %s90, 1
        %s160 = smul.addr %s159, 8
        %s161 = scalar_lea.vmem [#allocation2], %s160
        %p162 = scmp.lt.s32.totalorder %s21, 1
        %s163 = scalar_select %p162, %s21, 1
        %s164 = smul.addr %s163, 8
        %s165 = scalar_lea.vmem %s0, %s164
        %p166 = scmp.lt.s32.totalorder %s20, 0
        %s167 = scalar_select %p166, %s20, 0
        %s168 = smul.addr %s167, 8
        %s169 = scalar_lea.vmem %s1, %s168
        %v170 = vld [vmem:[%s165] sm:$0xff]
        %v171 = vadd.f32 %v170, 1.0
        %v172 = vmul.f32 %v171, 0.5
        %v173 = vmul.f32 %v172, 16.0
        %v174 = vmax.f32 %v173, 0.0
        %v175 = vmin.f32 %v174, 16.0
        %v176 = vlaneseq
        %v177 = vand.u32 %v176, 127
        %v178 = vcvt.s32.f32 %v177
        %180 = vset.pattern.permute.xlu0 0
        %181 = vperm.xlu0 %180, %v175
        %v182 = vpop.permute.xlu0 %181
        %v184 = vsub.f32 %v178, %v182
        %v185 = vand.u32 2147483647, %v184
        %v186 = vsub.f32 16.0, %v185
        %v187 = vmin.f32 %v185, %v186
        %v188 = vsub.f32 1.0, %v187
        %v189 = vmax.f32 %v188, 0.0
        %v190 = vld [vmem:[%s169] sm:$0xff]
        %v191 = vld [vmem:[%s169 + $0x8] sm:$0xff]
        %vm192 = vcmask 130048
        %v194 = vsel %vm192, %v189, 0
        %196 = vmatprep.subr.mxu0 0.0
        %197 = vmatpush1.msra.mxu0 %v190
        %198 = vmatprep.subr.mxu0 0.0
        %199 = vmatpush1.msra.mxu0 %v191
        %200 = vmatprep.subr.mxu0 0.0
        %201 = vmatpush1.msra.mxu0 0.0
        %202 = vmatprep.subr.mxu0 0.0
        %203 = vmatpush1.msra.mxu0 0.0
        %204 = vmatprep.subr.mxu0 0.0
        %205 = vmatpush1.msra.mxu0 0.0
        %206 = vmatprep.subr.mxu0 0.0
        %207 = vmatpush1.msra.mxu0 0.0
        %208 = vmatprep.subr.mxu0 0.0
        %209 = vmatpush1.msra.mxu0 0.0
        %210 = vmatprep.subr.mxu0 0.0
        %211 = vmatpush1.msra.mxu0 0.0
        %212 = vmatprep.subr.mxu0 0.0
        %213 = vmatpush1.msra.mxu0 0.0
        %214 = vmatprep.subr.mxu0 0.0
        %215 = vmatpush1.msra.mxu0 0.0
        %216 = vmatprep.subr.mxu0 0.0
        %217 = vmatpush1.msra.mxu0 0.0
        %218 = vmatprep.subr.mxu0 0.0
        %219 = vmatpush1.msra.mxu0 0.0
        %220 = vmatprep.subr.mxu0 0.0
        %221 = vmatpush1.msra.mxu0 0.0
        %222 = vmatprep.subr.mxu0 0.0
        %223 = vmatpush1.msra.mxu0 0.0
        %224 = vmatprep.subr.mxu0 0.0
        %225 = vmatpush1.msra.mxu0 0.0
        %226 = vmatprep.subr.mxu0 0.0
        %227 = vmatpush1.msra.mxu0 0.0
        %228 = vmatprep.subr.mxu0 0.0
        %229 = vmatpush1.msra.mxu0 0.0
        %230 = vmatprep.subr.mxu0 0.0
        %231 = vmatpush1.msra.mxu0 0.0
        %232 = vmatprep.subr.mxu0 0.0
        %233 = vmatpush1.msra.mxu0 0.0
        %234 = vmatprep.subr.mxu0 0.0
        %235 = vmatpush1.msra.mxu0 0.0
        %236 = vmatprep.subr.mxu0 0.0
        %237 = vmatpush1.msra.mxu0 0.0
        %238 = vmatprep.subr.mxu0 0.0
        %239 = vmatpush1.msra.mxu0 0.0
        %240 = vmatprep.subr.mxu0 0.0
        %241 = vmatpush1.msra.mxu0 0.0
        %242 = vmatprep.subr.mxu0 0.0
        %243 = vmatpush1.msra.mxu0 0.0
        %244 = vmatprep.subr.mxu0 0.0
        %245 = vmatpush1.msra.mxu0 0.0
        %246 = vmatprep.subr.mxu0 0.0
        %247 = vmatpush1.msra.mxu0 0.0
        %248 = vmatprep.subr.mxu0 0.0
        %249 = vmatpush1.msra.mxu0 0.0
        %250 = vmatprep.subr.mxu0 0.0
        %251 = vmatpush1.msra.mxu0 0.0
        %252 = vmatprep.subr.mxu0 0.0
        %253 = vmatpush1.msra.mxu0 0.0
        %254 = vmatprep.subr.mxu0 0.0
        %255 = vmatpush1.msra.mxu0 0.0
        %256 = vmatprep.subr.mxu0 0.0
        %257 = vmatpush1.msra.mxu0 0.0
        %258 = vmatprep.subr.mxu0 0.0
        %259 = vmatpush1.msra.mxu0 0.0
        %260 = vmatprep.mubr.f32.mxu0 0.0
        %261 = vmatmul.mubr.f32.gmra.mrb[0].mxu0 %v194
        %v262 = vpop.f32.mrb[0].mxu0
        %v263 = vadd.f32 0.0, %v262
        %v264 = vpop.f32.mrb[0].mxu0
        %265 = vdwg.mxu0
        %266 = vst [vmem:[%s161] sm:$0xff] %v263
        %s267 = sand.u32 %s90, 1
        %s268 = scalar_lea.sflag [#allocation3], %s267
        %s269 = sand.u32 %s90, 1
        %s270 = smul.addr %s269, 8
        %s271 = scalar_lea.vmem [#allocation2], %s270
        // Predicated region
        $region29: #{tpu_custom_call.1} parent=27 // pred_check
          %p272 = pneg %p100
        $region30: #{tpu_custom_call.1} parent=27 // pred_check_branch
          %274 = sbr.rel (%p272) target = $region32
        $region31: #{tpu_custom_call.1} parent=27 // pred_region
          %s276 = ssub.s32 128, 128
          %277 = vsyncadd %s268, %s276
          %s278 = sadd.s32 %s20, %s21
          %s279 = smul.addr %s278, 128
          %s280 = scalar_lea.hbm %s2, %s279
          %s282 = sshll.u32 %s271, 4
          %s283 = int_to_ptr.vmem [resolvable:$true] %s282
          %285 = dma.vmem_to_hbm [thread:$0]  %s283, 128, %s280, %s268
        $region32: #{tpu_custom_call.1} parent=27 // pred_fallthru
          _
      $region28: #{tpu_custom_call.1} parent=5 // pred_fallthru
        _
      %p286 = scmp.le.s32.totalorder 2, %s11
      // Predicated region
      $region33: #{tpu_custom_call.1} parent=5 // pred_check
        %p287 = pneg %p286
      $region34: #{tpu_custom_call.1} parent=5 // pred_check_branch
        %289 = sbr.rel (%p287) target = $region36
      $region35: #{tpu_custom_call.1} parent=5 // pred_region
        %s290 = ssub.s32 %s11, 2
        // Predicated region
        $region37: #{tpu_custom_call.1} parent=35 // pred_check
          %p291 = pneg %p106
        $region38: #{tpu_custom_call.1} parent=35 // pred_check_branch
          %293 = sbr.rel (%p291) target = $region40
        $region39: #{tpu_custom_call.1} parent=35 // pred_region
          %s294 = sand.u32 %s91, 1
          %s295 = scalar_lea.sflag [#allocation3], %s294
          %s296 = sand.u32 %s91, 1
          %s297 = smul.addr %s296, 8
          %s298 = scalar_lea.vmem [#allocation2], %s297
          %299 = dma.done %s295, 128
        $region40: #{tpu_custom_call.1} parent=35 // pred_fallthru
          _
      $region36: #{tpu_custom_call.1} parent=5 // pred_fallthru
        _
    $region6: #{tpu_custom_call.1} parent=1 // loop_footer
      %s15 = sadd.s32 1, %s11
    $region7: #{tpu_custom_call.1} parent=1 // loop_footer_branch
      %10 = sbr.rel target = $region3
    $region8: #{tpu_custom_call.1} parent=1 // loop_exit
      _
    %300 = vsyncpa [#allocation3], 1
    %s301 = scalar_lea.sflag [#allocation3], 1
    %302 = vsyncpa %s301, 1

</llo_original>
